<compile_context>
chip_gen: v5e
topology: v5e:2x2
jax: 0.10.0
libtpu: 0.0.40
codegen_flags: <defaults>
</compile_context>

<pallas_src>
import jax
import jax.numpy as jnp
from jax import lax
from jax.experimental import pallas as pl
from jax.experimental.pallas import tpu as pltpu

P_DROP = 0.2
_KEEP_SCALE = 1.0 / (1.0 - P_DROP)
_DROP_THRESHOLD = int(P_DROP * (1 << 31))  # compare against top-31 hash bits


def model_kernel(seed_ref, scale_ref, x_ref, w_ref, out_ref):
    # ---- v1 = embed(x1) : (B,16) @ (16,32) -> (B,32), MXU, f32 acc ----
    v1 = jnp.dot(x_ref[...], w_ref[...], preferred_element_type=jnp.float32)

    # ---- v3 = v1 @ v1.T : fold the transpose into dot_general (contract on
    #      dim 1 of both operands) so no explicit transpose is materialized ----
    v3 = lax.dot_general(
        v1, v1,
        dimension_numbers=(((1,), (1,)), ((), ())),
        preferred_element_type=jnp.float32,
    )

    # ---- v5 = v3 / scale : one scalar reciprocal, then a vector multiply ----
    inv_scale = 1.0 / scale_ref[0]
    v5 = v3 * inv_scale

    # ---- v6 = softmax(v5, -1) ----
    m = jnp.max(v5, axis=-1, keepdims=True)
    e = jnp.exp(v5 - m)
    v6 = e / jnp.sum(e, axis=-1, keepdims=True)

    # ---- v7 = dropout(v6, p=0.2, training=True) ----
    # Counter-based hash (murmur3 finalizer) over element indices + seed gives
    # 31 uniform bits per element; keep iff bits >= p*2^31.  Pure 32-bit
    # integer VPU ops -> lowers on TPU and in interpret mode alike.
    # TODO(synk): dropout RNG cannot match PyTorch's generator bit-for-bit;
    # only distributional equivalence is provided.
    B = v3.shape[0]
    rows = lax.broadcasted_iota(jnp.int32, (B, B), 0)
    cols = lax.broadcasted_iota(jnp.int32, (B, B), 1)
    h = (rows * B + cols + seed_ref[0]).astype(jnp.uint32)
    h = (h ^ (h >> 16)) * jnp.uint32(0x85EBCA6B)
    h = (h ^ (h >> 13)) * jnp.uint32(0xC2B2AE35)
    h = h ^ (h >> 16)
    bits31 = (h >> 1).astype(jnp.int32)              # uniform in [0, 2^31)
    keep = bits31 >= jnp.int32(_DROP_THRESHOLD)
    v7 = jnp.where(keep, v6 * _KEEP_SCALE, 0.0)

    # ---- v8 = v7 @ v1 : (B,B) @ (B,32) -> (B,32) ----
    out_ref[...] = jnp.dot(v7, v1, preferred_element_type=jnp.float32).astype(
        out_ref.dtype
    )


def model_forward(x, w, scale, seed):
    B = x.shape[0]
    H = w.shape[1]
    return pl.pallas_call(
        model_kernel,
        out_shape=jax.ShapeDtypeStruct((B, H), jnp.float32),
        in_specs=[
            pl.BlockSpec(memory_space=pltpu.MemorySpace.SMEM),   # seed  (1,) int32
            pl.BlockSpec(memory_space=pltpu.MemorySpace.SMEM),   # scale (1,) f32
            pl.BlockSpec(memory_space=pltpu.MemorySpace.VMEM),   # x (B,16)
            pl.BlockSpec(memory_space=pltpu.MemorySpace.VMEM),   # w (16,32)
        ],
        out_specs=pl.BlockSpec(memory_space=pltpu.MemorySpace.VMEM),
    )(seed, scale, x, w)


if __name__ == "__main__":
    key = jax.random.PRNGKey(0)
    kx, kw = jax.random.split(key)

    # Deterministic inputs / parameters (shapes from the PyTorch module).
    x1 = jax.random.normal(kx, (2, 16), dtype=jnp.float32)              # torch.randn(2, 16)
    w_embed = jax.random.normal(kw, (16, 32), dtype=jnp.float32) * 0.1  # Linear(16,32,bias=False), pre-transposed
    scale = jnp.array([2000.0], dtype=jnp.float32)                      # nn.Parameter([2000.0])
    seed = jnp.array([42], dtype=jnp.int32)                             # dropout seed (training=True)

    out = model_forward(x1, w_embed, scale, seed)
    out = jax.block_until_ready(out)
    assert out.shape == (2, 32) and out.dtype == jnp.float32
    assert bool(jnp.all(jnp.isfinite(out)))
    print("KERNEL_OK")
</pallas_src>

<mosaic_0001>
module attributes {stable_mosaic.version = 11 : i64} {
  func.func @model_kernel(%arg0: memref<1xi32, #tpu.memory_space<smem>>, %arg1: memref<1xf32, #tpu.memory_space<smem>>, %arg2: memref<2x16xf32, #tpu.memory_space<vmem>>, %arg3: memref<16x32xf32, #tpu.memory_space<vmem>>, %arg4: memref<2x32xf32, #tpu.memory_space<vmem>>) attributes {dimension_semantics = [], scalar_prefetch = 0 : i64, scratch_operands = 0 : i64, tpu.core_type = #tpu.core_type<tc>} {
    %c0 = arith.constant 0 : index
    %c0_0 = arith.constant 0 : index
    %0 = vector.load %arg2[%c0, %c0_0] : memref<2x16xf32, #tpu.memory_space<vmem>>, vector<2x16xf32>
    %c0_1 = arith.constant 0 : index
    %c0_2 = arith.constant 0 : index
    %1 = vector.load %arg3[%c0_1, %c0_2] : memref<16x32xf32, #tpu.memory_space<vmem>>, vector<16x32xf32>
    %cst = arith.constant dense<0.000000e+00> : vector<2x32xf32>
    %2 = tpu.matmul %0, %1, %cst {dimension_numbers = #tpu.dot_dimension_numbers<[1], [0], [0], [1], [0, 0, 1, 1], [], []>} : vector<2x16xf32>, vector<16x32xf32>, vector<2x32xf32> -> vector<2x32xf32>
    %cst_3 = arith.constant dense<0.000000e+00> : vector<2x2xf32>
    %3 = tpu.matmul %2, %2, %cst_3 {dimension_numbers = #tpu.dot_dimension_numbers<[1], [1], [0], [0], [0, 0, 1, 0], [], []>} : vector<2x32xf32>, vector<2x32xf32>, vector<2x2xf32> -> vector<2x2xf32>
    %c0_4 = arith.constant 0 : index
    %4 = memref.load %arg1[%c0_4] : memref<1xf32, #tpu.memory_space<smem>>
    %cst_5 = arith.constant 1.000000e+00 : f32
    %5 = arith.divf %cst_5, %4 : f32
    %6 = vector.broadcast %5 : f32 to vector<2x2xf32>
    %7 = arith.mulf %3, %6 : vector<2x2xf32>
    %cst_6 = arith.constant dense<0xFF800000> : vector<2xf32>
    %8 = vector.multi_reduction <maximumf>, %7, %cst_6 [1] : vector<2x2xf32> to vector<2xf32>
    %9 = vector.shape_cast %8 : vector<2xf32> to vector<2x1xf32>
    %10 = vector.broadcast %9 : vector<2x1xf32> to vector<2x2xf32>
    %11 = arith.subf %7, %10 : vector<2x2xf32>
    %12 = math.exp %11 : vector<2x2xf32>
    %cst_7 = arith.constant dense<0.000000e+00> : vector<2xf32>
    %13 = vector.multi_reduction <add>, %12, %cst_7 [1] : vector<2x2xf32> to vector<2xf32>
    %14 = vector.shape_cast %13 : vector<2xf32> to vector<2x1xf32>
    %15 = vector.broadcast %14 : vector<2x1xf32> to vector<2x2xf32>
    %16 = arith.divf %12, %15 : vector<2x2xf32>
    %17 = tpu.iota {dimensions = array<i32: 0>} : vector<2x2xi32>
    %18 = tpu.iota {dimensions = array<i32: 1>} : vector<2x2xi32>
    %c2_i32 = arith.constant 2 : i32
    %19 = vector.broadcast %c2_i32 : i32 to vector<2x2xi32>
    %20 = arith.muli %17, %19 : vector<2x2xi32>
    %21 = arith.addi %20, %18 : vector<2x2xi32>
    %c0_8 = arith.constant 0 : index
    %22 = memref.load %arg0[%c0_8] : memref<1xi32, #tpu.memory_space<smem>>
    %23 = vector.broadcast %22 : i32 to vector<2x2xi32>
    %24 = arith.addi %21, %23 : vector<2x2xi32>
    %c16_i32 = arith.constant 16 : i32
    %25 = vector.broadcast %c16_i32 : i32 to vector<2x2xi32>
    %26 = arith.shrui %24, %25 : vector<2x2xi32>
    %27 = arith.xori %24, %26 : vector<2x2xi32>
    %c-2048144789_i32 = arith.constant -2048144789 : i32
    %28 = vector.broadcast %c-2048144789_i32 : i32 to vector<2x2xi32>
    %29 = arith.muli %27, %28 : vector<2x2xi32>
    %c13_i32 = arith.constant 13 : i32
    %30 = vector.broadcast %c13_i32 : i32 to vector<2x2xi32>
    %31 = arith.shrui %29, %30 : vector<2x2xi32>
    %32 = arith.xori %29, %31 : vector<2x2xi32>
    %c-1028477387_i32 = arith.constant -1028477387 : i32
    %33 = vector.broadcast %c-1028477387_i32 : i32 to vector<2x2xi32>
    %34 = arith.muli %32, %33 : vector<2x2xi32>
    %c16_i32_9 = arith.constant 16 : i32
    %35 = vector.broadcast %c16_i32_9 : i32 to vector<2x2xi32>
    %36 = arith.shrui %34, %35 : vector<2x2xi32>
    %37 = arith.xori %34, %36 : vector<2x2xi32>
    %c1_i32 = arith.constant 1 : i32
    %38 = vector.broadcast %c1_i32 : i32 to vector<2x2xi32>
    %39 = arith.shrui %37, %38 : vector<2x2xi32>
    %c429496729_i32 = arith.constant 429496729 : i32
    %40 = vector.broadcast %c429496729_i32 : i32 to vector<2x2xi32>
    %41 = arith.cmpi sge, %39, %40 : vector<2x2xi32>
    %cst_10 = arith.constant 1.250000e+00 : f32
    %42 = vector.broadcast %cst_10 : f32 to vector<2x2xf32>
    %43 = arith.mulf %16, %42 : vector<2x2xf32>
    %cst_11 = arith.constant 0.000000e+00 : f32
    %44 = vector.broadcast %cst_11 : f32 to vector<2x2xf32>
    %45 = arith.select %41, %43, %44 : vector<2x2xi1>, vector<2x2xf32>
    %cst_12 = arith.constant dense<0.000000e+00> : vector<2x32xf32>
    %46 = tpu.matmul %45, %2, %cst_12 {dimension_numbers = #tpu.dot_dimension_numbers<[1], [0], [0], [1], [0, 0, 1, 1], [], []>} : vector<2x2xf32>, vector<2x32xf32>, vector<2x32xf32> -> vector<2x32xf32>
    %c0_13 = arith.constant 0 : index
    %c0_14 = arith.constant 0 : index
    %47 = vector.load %arg4[%c0_13, %c0_14] : memref<2x32xf32, #tpu.memory_space<vmem>>, vector<2x32xf32>
    tpu.vector_store %arg4[%c0_13, %c0_14], %46 {strides = array<i32>} : memref<2x32xf32, #tpu.memory_space<vmem>>, vector<2x32xf32>,
    return
  }
}

</mosaic_0001>

<llo_original>
// kernel: tpu_custom_call.1
$region0: #{tpu_custom_call.1}
  #allocation0 [shape = 'u32[]', space=smem, size = 0x4, offset = 0x4, fixed_abs, tag = 'smem constant byte address 0x4 - core index']
  #allocation1 [shape = 'u32[72,128]{1,0:T(1,128)}', space=vmem, size = 0x9000, scoped, tag = 'internal scratch']
  #allocation2 [shape = 's32[1]{0:T(128)S(6)}', space=smem, size = 0x200, scoped, tag = 'scoped memory for tpu_custom_call.1']
  #allocation3 [shape = 'f32[1]{0:T(128)S(6)}', space=smem, size = 0x200, scoped, tag = 'scoped memory for tpu_custom_call.1']
  %s0 = inlined_call_operand.<no memory space> [shape: s32[1], index: 0, kind: input, shape index: {}]
  %s1 = inlined_call_operand.<no memory space> [shape: f32[1], index: 1, kind: input, shape index: {}]
  %s2 = inlined_call_operand.vmem [shape: f32[2,16], index: 2, kind: input, shape index: {}]
  %s3 = inlined_call_operand.hbm [shape: f32[16,32], index: 3, kind: input, shape index: {}]
  %s4 = inlined_call_operand.hbm [shape: f32[2,32], index: 4, kind: output, shape index: {}]
  %s5 = sld [smem:[#allocation0]]
  $region30: #{tpu_custom_call.1} parent=0
    _
  %s7 = ssub.s32 1, %s5
  %s8 = scalar_select 0, %s7, %s5
  %9 = sst [smem:[#allocation2]] %s0
  %10 = sst [smem:[#allocation3]] %s1
  $region1: #{tpu_custom_call.1} parent=0
    #allocation4 [shape = 'u8[8192]{0}', space=vmem, size = 0x2000, scoped, tag = 'input window, operand 3, single buffered']
    #allocation5 [shape = 's32[1]{0}', space=sflag, size = 0x4, scoped, tag = 'scoped memory for tpu_custom_call.1']
    #allocation6 [shape = 's32[1]{0}', space=sflag, size = 0x4, scoped, tag = 'scoped memory for tpu_custom_call.1']
    #allocation7 [shape = 'u8[1024]{0}', space=vmem, size = 0x400, scoped, tag = 'output window, operand 0, single buffered']
    %11 = vsyncpa [#allocation5], 0
    %12 = vsyncpa [#allocation6], 0
    // Predicated region
    $region2: #{tpu_custom_call.1} parent=1 // pred_check
      _
    $region3: #{tpu_custom_call.1} parent=1 // pred_check_branch
      %14 = sbr.rel (0) target = $region5
    $region4: #{tpu_custom_call.1} parent=1 // pred_region
      _
    $region5: #{tpu_custom_call.1} parent=1 // pred_fallthru
      _
    // Predicated region
    $region6: #{tpu_custom_call.1} parent=1 // pred_check
      _
    $region7: #{tpu_custom_call.1} parent=1 // pred_check_branch
      %16 = sbr.rel (0) target = $region9
    $region8: #{tpu_custom_call.1} parent=1 // pred_region
      _
    $region9: #{tpu_custom_call.1} parent=1 // pred_fallthru
      _
    // Predicated region
    $region10: #{tpu_custom_call.1} parent=1 // pred_check
      _
    $region11: #{tpu_custom_call.1} parent=1 // pred_check_branch
      %18 = sbr.rel (0) target = $region13
    $region12: #{tpu_custom_call.1} parent=1 // pred_region
      _
    $region13: #{tpu_custom_call.1} parent=1 // pred_fallthru
      _
    // Predicated region
    $region14: #{tpu_custom_call.1} parent=1 // pred_check
      _
    $region15: #{tpu_custom_call.1} parent=1 // pred_check_branch
      %20 = sbr.rel (0) target = $region17
    $region16: #{tpu_custom_call.1} parent=1 // pred_region
      %22 = vsyncadd [#allocation5], 0
      %s23 = sshll.u32 %s3, 4
      %s24 = int_to_ptr.hbm [resolvable:$true] %s23
      %s25 = sshll.u32 [#allocation4], 4
      %s26 = int_to_ptr.vmem [resolvable:$true] %s25
      %31 = dma.hbm_to_vmem [thread:$0]  %s24, 256, %s26, [#allocation5], 128, 128, 8
    $region17: #{tpu_custom_call.1} parent=1 // pred_fallthru
      _
    // Predicated region
    $region18: #{tpu_custom_call.1} parent=1 // pred_check
      _
    $region19: #{tpu_custom_call.1} parent=1 // pred_check_branch
      %33 = sbr.rel (0) target = $region21
    $region20: #{tpu_custom_call.1} parent=1 // pred_region
      %35 = dma.done [#allocation5], 256
    $region21: #{tpu_custom_call.1} parent=1 // pred_fallthru
      _
    %v36 = vld [vmem:[%s2] sm:$0x3]
    %v37 = vld [vmem:[#allocation4] sm:$0xff]
    %v38 = vld [vmem:[#allocation4 + $0x8] sm:$0xff]
    %vm39 = vcmask 130048
    %v41 = vsel %vm39, %v36, 0
    %43 = vmatpush.msra.mxu0 0.0
    %44 = vmatpush.msra.mxu0 0.0
    %45 = vmatpush.msra.mxu0 0.0
    %46 = vmatpush.msra.mxu0 0.0
    %47 = vmatpush.msra.mxu0 0.0
    %48 = vmatpush.msra.mxu0 0.0
    %49 = vmatpush.msra.mxu0 0.0
    %50 = vmatpush.msra.mxu0 0.0
    %51 = vmatpush.msra.mxu0 0.0
    %52 = vmatpush.msra.mxu0 0.0
    %53 = vmatpush.msra.mxu0 0.0
    %54 = vmatpush.msra.mxu0 0.0
    %55 = vmatpush.msra.mxu0 0.0
    %56 = vmatpush.msra.mxu0 0.0
    %57 = vmatpush.msra.mxu0 %v38
    %58 = vmatpush.msra.mxu0 %v37
    %59 = vmatmul.f32.gmra.mxu0 %v41
    %v60 = vpop.f32.mrf.mxu0
    %v61 = vadd.f32 0.0, %v60
    %62 = vdwg.mxu0
    %vm63 = vcmask 261120
    %v65 = vsel %vm63, %v61, 0
    %67 = vmatpush.xpose.msra.mxu0 0.0
    %68 = vmatpush.xpose.msra.mxu0 0.0
    %69 = vmatpush.xpose.msra.mxu0 0.0
    %70 = vmatpush.xpose.msra.mxu0 0.0
    %71 = vmatpush.xpose.msra.mxu0 0.0
    %72 = vmatpush.xpose.msra.mxu0 0.0
    %73 = vmatpush.xpose.msra.mxu0 0.0
    %74 = vmatpush.xpose.msra.mxu0 0.0
    %75 = vmatpush.xpose.msra.mxu0 0.0
    %76 = vmatpush.xpose.msra.mxu0 0.0
    %77 = vmatpush.xpose.msra.mxu0 0.0
    %78 = vmatpush.xpose.msra.mxu0 0.0
    %79 = vmatpush.xpose.msra.mxu0 0.0
    %80 = vmatpush.xpose.msra.mxu0 0.0
    %81 = vmatpush.xpose.msra.mxu0 0.0
    %82 = vmatpush.xpose.msra.mxu0 %v65
    %83 = vmatmul.f32.gmra.mxu0 %v65
    %v84 = vpop.f32.mrf.mxu0
    %v85 = vadd.f32 0.0, %v84
    %86 = vdwg.mxu0
    %s87 = sld [smem:[#allocation3]]
    %v88 = vstv %s87
    %v89 = vrcp.pop %v88
    %v90 = vmul.f32 %v88, %v89
    %v91 = vsub.f32 1.0, %v90
    %v92 = vmul.f32 %v89, %v91
    %v93 = vadd.f32 %v89, %v92
    %vm94 = vweird.f32 %v88
    %vm95 = vweird.f32 %v89
    %vm96 = vmor %vm94, %vm95
    %v97 = vsel %vm96, %v89, %v93
    %v98 = vand.u32 2147483647, %v88
    %vm99 = vcmp.eq.f32.partialorder %v98, 8.507059e+37
    %v100 = vand.u32 %v88, 2147483648
    %v101 = vor.u32 1.1754944e-38, %v100
    %v102 = vsel %vm99, %v101, %v97
    %s103 = vtos %v102
    %v104 = vstv %s103
    %v105 = vmul.f32 %v85, %v104
    %vm106 = vcmask 9216
    %v107 = vsel %vm106, %v105, -inf
    %108 = vmax.xlane.f32.xlu0 %v107
    %v109 = vpop.xlane.xlu0 %108
    %v110 = vsub.f32 %v105, %v109
    %v111 = vmul.f32 %v110, 1.442695
    %v112 = vpow.pop %v111
    %v113 = vsel %vm106, %v112, 0.0
    %114 = vadd.xlane.f32.xlu0 %v113
    %v115 = vpop.xlane.xlu0 %114
    %v116 = vrcp.pop %v115
    %v117 = vmul.f32 %v115, %v116
    %v118 = vsub.f32 1.0, %v117
    %v119 = vmul.f32 %v116, %v118
    %v120 = vadd.f32 %v116, %v119
    %vm121 = vweird.f32 %v115
    %vm122 = vweird.f32 %v116
    %vm123 = vmor %vm121, %vm122
    %v124 = vsel %vm123, %v116, %v120
    %v125 = vand.u32 2147483647, %v115
    %vm126 = vcmp.eq.f32.partialorder %v125, 8.507059e+37
    %v127 = vand.u32 %v115, 2147483648
    %v128 = vor.u32 1.1754944e-38, %v127
    %v129 = vsel %vm126, %v128, %v124
    %v130 = vmul.f32 %v112, %v129
    %v131 = vlaneseq
    %v132 = vshrl.u32 %v131, 7
    %v133 = vlaneseq
    %v134 = vand.u32 %v133, 127
    %v135 = vmul.u32 %v132, 2
    %v136 = vadd.s32 %v135, %v134
    %s137 = sld [smem:[#allocation2]]
    %v138 = vstv %s137
    %v139 = vadd.s32 %v136, %v138
    %v140 = vshrl.u32 %v139, 16
    %v141 = vxor.u32 %v139, %v140
    %v142 = vmul.u32 %v141, 2246822507
    %v143 = vshrl.u32 %v142, 13
    %v144 = vxor.u32 %v142, %v143
    %v145 = vmul.u32 %v144, 3266489909
    %v146 = vshrl.u32 %v145, 16
    %v147 = vxor.u32 %v145, %v146
    %v148 = vshrl.u32 %v147, 1
    %vm149 = vcmp.ge.s32.totalorder %v148, 429496729
    %v150 = vmul.f32 %v130, 1.25
    %v151 = vsel %vm149, %v150, 0.0
    %vm152 = vcmask 15360
    %v154 = vsel %vm152, %v151, 0
    %vm156 = vcmask 1041408
    %v157 = vsel %vm156, %v61, 0
    %159 = vmatpush.msra.mxu0 0.0
    %160 = vmatpush.msra.mxu0 0.0
    %161 = vmatpush.msra.mxu0 0.0
    %162 = vmatpush.msra.mxu0 0.0
    %163 = vmatpush.msra.mxu0 0.0
    %164 = vmatpush.msra.mxu0 0.0
    %165 = vmatpush.msra.mxu0 0.0
    %166 = vmatpush.msra.mxu0 0.0
    %167 = vmatpush.msra.mxu0 0.0
    %168 = vmatpush.msra.mxu0 0.0
    %169 = vmatpush.msra.mxu0 0.0
    %170 = vmatpush.msra.mxu0 0.0
    %171 = vmatpush.msra.mxu0 0.0
    %172 = vmatpush.msra.mxu0 0.0
    %173 = vmatpush.msra.mxu0 0.0
    %174 = vmatpush.msra.mxu0 %v157
    %175 = vmatmul.f32.gmra.mxu0 %v154
    %v176 = vpop.f32.mrf.mxu0
    %v177 = vadd.f32 0.0, %v176
    %178 = vdwg.mxu0
    %vm179 = vcmask 254976
    %180 = vst.msk [vmem:[#allocation7] sm:$0x3] %vm179, %v177
    // Predicated region
    $region22: #{tpu_custom_call.1} parent=1 // pred_check
      _
    $region23: #{tpu_custom_call.1} parent=1 // pred_check_branch
      %182 = sbr.rel (0) target = $region25
    $region24: #{tpu_custom_call.1} parent=1 // pred_region
      %184 = vsyncadd [#allocation6], 0
      %s186 = sshll.u32 [#allocation7], 4
      %s187 = int_to_ptr.vmem [resolvable:$true] %s186
      %s188 = sshll.u32 %s4, 4
      %s189 = int_to_ptr.hbm [resolvable:$true] %s188
      %191 = dma.vmem_to_hbm [thread:$0]  %s187, 32, %s189, [#allocation6]
    $region25: #{tpu_custom_call.1} parent=1 // pred_fallthru
      _
    // Predicated region
    $region26: #{tpu_custom_call.1} parent=1 // pred_check
      _
    $region27: #{tpu_custom_call.1} parent=1 // pred_check_branch
      %193 = sbr.rel (0) target = $region29
    $region28: #{tpu_custom_call.1} parent=1 // pred_region
      %195 = dma.done [#allocation6], 32
    $region29: #{tpu_custom_call.1} parent=1 // pred_fallthru
      _
    %196 = vsyncpa [#allocation5], 1
    %197 = vsyncpa [#allocation6], 1

</llo_original>
